<compile_context>
chip_gen: v7x
topology: tpu7x:2x2x1
jax: 0.10.0
libtpu: 0.0.40
codegen_flags: <defaults>
</compile_context>

<pallas_src>
import functools
import math

import jax
import jax.numpy as jnp
from jax.experimental import pallas as pl
from jax.experimental.pallas import tpu as pltpu


# Padded gate logits: max(x,0)=0, x*t=0, log1p(exp(-|x|))=0  -> BCE contribution 0.
_GATE_PAD_LOGIT = -30000.0

_MEL_BLOCK_R = 256   # sublane-dim tile (rows of the flattened (B*n_mel, T) slab)
_MEL_BLOCK_T = 512   # lane-dim tile (frames); multiple of 128


def _round_up(x, m):
    return ((x + m - 1) // m) * m


def _loss_kernel(mel_out_ref, mel_post_ref, mel_tgt_ref,
                 gate_out_ref, gate_tgt_ref, mu_ref, logvar_ref,
                 mel_loss_ref, gate_loss_ref, kl_loss_ref,
                 acc_ref, *, n_mel_elems, n_gate_elems):
    i = pl.program_id(0)
    j = pl.program_id(1)
    is_first = jnp.logical_and(i == 0, j == 0)
    is_last = jnp.logical_and(i == pl.num_programs(0) - 1,
                              j == pl.num_programs(1) - 1)

    # ---- one-time work: zero the accumulator, gate BCE, KL (tiny, resident) ----
    @pl.when(is_first)
    def _():
        acc_ref[...] = jnp.zeros_like(acc_ref)

        x = gate_out_ref[...].astype(jnp.float32)
        t = gate_tgt_ref[...].astype(jnp.float32)
        e = jnp.exp(-jnp.abs(x))
        # log1p(e) without relying on a log1p lowering: for tiny e, log1p(e) ~= e.
        log1p_e = jnp.where(e < 1e-6, e, jnp.log(1.0 + e))
        bce = jnp.maximum(x, 0.0) - x * t + log1p_e
        gate_loss_ref[0, 0] = jnp.sum(bce) * (1.0 / n_gate_elems)

        mu = mu_ref[...].astype(jnp.float32)
        lv = logvar_ref[...].astype(jnp.float32)
        kl_loss_ref[0, 0] = -0.5 * jnp.sum(1.0 + lv - mu * mu - jnp.exp(lv))

    # ---- steady state: pure VPU (cast, sub, FMA) -> hidden under the mel DMA ----
    tgt = mel_tgt_ref[...].astype(jnp.float32)
    d1 = mel_out_ref[...].astype(jnp.float32) - tgt
    d2 = mel_post_ref[...].astype(jnp.float32) - tgt
    acc_ref[...] += d1 * d1 + d2 * d2

    # ---- finalize: single cross-lane reduction + scalar store ----
    @pl.when(is_last)
    def _():
        mel_loss_ref[0, 0] = jnp.sum(acc_ref[...]) * (1.0 / n_mel_elems)


def _pallas_losses(mel_out, mel_out_postnet, mel_target,
                   gate_out, gate_target, mu, logvar,
                   *, block_r=_MEL_BLOCK_R, block_t=_MEL_BLOCK_T):
    # True element counts (used for the means; padding is neutral).
    n_mel_elems = int(mel_target.size)
    n_gate_elems = int(gate_out.size)

    B, n_mel, T = mel_target.shape
    R = B * n_mel

    # Tile sizes: shrink to the (padded) array if it is small; keep (8,128) multiples.
    R_pad = _round_up(R, 8)
    block_r = min(block_r, R_pad)
    R_pad = _round_up(R_pad, block_r)
    T_pad = _round_up(T, 128)
    block_t = min(block_t, T_pad)
    T_pad = _round_up(T_pad, block_t)

    def prep_mel(x):
        x = x.reshape(R, T)
        if R_pad != R or T_pad != T:
            x = jnp.pad(x, ((0, R_pad - R), (0, T_pad - T)))
        return x

    mel_out_p = prep_mel(mel_out)
    mel_post_p = prep_mel(mel_out_postnet)
    mel_tgt_p = prep_mel(mel_target)

    # Gate tensors: lane-dense (1, B*T) row, padded so BCE of the pad region is 0.
    G_pad = _round_up(max(n_gate_elems, 1), 128)
    gate_out_p = jnp.pad(gate_out.reshape(1, -1),
                         ((0, 0), (0, G_pad - n_gate_elems)),
                         constant_values=_GATE_PAD_LOGIT)
    gate_tgt_p = jnp.pad(gate_target.reshape(1, -1),
                         ((0, 0), (0, G_pad - n_gate_elems)))

    grid = (R_pad // block_r, T_pad // block_t)

    mel_spec = pl.BlockSpec((block_r, block_t), lambda i, j: (i, j))

    def resident(shape):
        return pl.BlockSpec(shape, lambda i, j: (0, 0))

    smem_scalar = pl.BlockSpec((1, 1), lambda i, j: (0, 0),
                               memory_space=pltpu.MemorySpace.SMEM)
    scalar = jax.ShapeDtypeStruct((1, 1), jnp.float32)

    kernel = functools.partial(_loss_kernel,
                               n_mel_elems=float(n_mel_elems),
                               n_gate_elems=float(n_gate_elems))

    in_bytes = sum(int(a.size) * a.dtype.itemsize for a in
                   (mel_out_p, mel_post_p, mel_tgt_p,
                    gate_out_p, gate_tgt_p, mu, logvar))
    cost = pl.CostEstimate(
        flops=6 * n_mel_elems + 6 * n_gate_elems + 5 * int(mu.size),
        transcendentals=2 * n_gate_elems + int(mu.size),
        bytes_accessed=in_bytes + 12,
    )

    mel_loss, gate_loss, kl_loss = pl.pallas_call(
        kernel,
        out_shape=(scalar, scalar, scalar),
        grid_spec=pltpu.PrefetchScalarGridSpec(
            num_scalar_prefetch=0,
            grid=grid,
            in_specs=[mel_spec, mel_spec, mel_spec,
                      resident(gate_out_p.shape), resident(gate_tgt_p.shape),
                      resident(mu.shape), resident(logvar.shape)],
            out_specs=(smem_scalar, smem_scalar, smem_scalar),
            scratch_shapes=[pltpu.VMEM((block_r, block_t), jnp.float32)],
        ),
        compiler_params=pltpu.CompilerParams(
            dimension_semantics=("arbitrary", "arbitrary")),
        cost_estimate=cost,
    )(mel_out_p, mel_post_p, mel_tgt_p, gate_out_p, gate_tgt_p, mu, logvar)

    return mel_loss[0, 0], gate_loss[0, 0], kl_loss[0, 0]


class Tacotron2LossVAE:
    """JAX/Pallas port of Tacotron2Loss_VAE.forward."""

    def __init__(self, anneal_function='logistic', anneal_lag=50000,
                 anneal_k=0.0001, anneal_x0=10000, anneal_upper=0.2):
        self.anneal_function = anneal_function
        self.lag = anneal_lag
        self.k = anneal_k
        self.x0 = anneal_x0
        self.upper = anneal_upper

    def kl_anneal_function(self, anneal_function, lag, step, k, x0, upper):
        if anneal_function == 'logistic':
            return float(upper / (upper + math.exp(-k * (step - x0))))
        elif anneal_function == 'linear':
            if step > lag:
                return min(upper, step / x0)
            else:
                return 0
        elif anneal_function == 'constant':
            return 0.001

    def __call__(self, model_output, targets, step):
        mel_target, gate_target = targets[0], targets[1]
        mel_out, mel_out_postnet, gate_out, _, mu, logvar, _, _ = model_output

        # Inputs are passed in their native dtype (no wrapper up-cast); the kernel
        # casts to f32 and accumulates in f32.  gate.view(-1, 1) is a no-op for the
        # elementwise BCE + mean, so flat (1, B*T) is used instead.
        mel_loss, gate_loss, kl_loss = _pallas_losses(
            mel_out, mel_out_postnet, mel_target,
            gate_out, gate_target, mu, logvar)

        kl_weight = self.kl_anneal_function(
            self.anneal_function, self.lag, step, self.k, self.x0, self.upper)
        recon_loss = mel_loss + gate_loss
        total_loss = recon_loss + kl_weight * kl_loss
        return total_loss, recon_loss, kl_loss, kl_weight


if __name__ == "__main__":
    loss_fn = Tacotron2LossVAE(anneal_function='logistic', anneal_lag=50000,
                               anneal_k=0.0001, anneal_x0=10000, anneal_upper=0.2)

    # Two configs: a tiny one (single tile) and a ragged multi-tile one that
    # exercises the padded / pipelined reduction path.
    configs = [
        dict(B=2, n_mel=8, T=16, latent=32),     # small, single grid step
        dict(B=4, n_mel=80, T=700, latent=32),   # ragged rows/frames, multi-tile grid
    ]

    key = jax.random.PRNGKey(0)
    for cfg in configs:
        B, n_mel, T, latent = cfg["B"], cfg["n_mel"], cfg["T"], cfg["latent"]
        key, *ks = jax.random.split(key, 8)

        mel_out = jax.random.normal(ks[0], (B, n_mel, T), jnp.float32)
        mel_out_postnet = jax.random.normal(ks[1], (B, n_mel, T), jnp.float32)
        mel_target = jax.random.normal(ks[2], (B, n_mel, T), jnp.float32)
        gate_out = jax.random.normal(ks[3], (B, T), jnp.float32)
        gate_target = (jax.random.uniform(ks[4], (B, T)) > 0.5).astype(jnp.float32)
        mu = jax.random.normal(ks[5], (B, latent), jnp.float32)
        logvar = 0.1 * jax.random.normal(ks[6], (B, latent), jnp.float32)

        model_output = (mel_out, mel_out_postnet, gate_out, None, mu, logvar, None, None)
        targets = (mel_target, gate_target)

        total_loss, recon_loss, kl_loss, kl_weight = loss_fn(model_output, targets, step=5000)
        jax.block_until_ready((total_loss, recon_loss, kl_loss))

        # Pure-JAX reference check.
        mel_ref = (jnp.mean((mel_out - mel_target) ** 2)
                   + jnp.mean((mel_out_postnet - mel_target) ** 2))
        x, t = gate_out, gate_target
        gate_ref = jnp.mean(jnp.maximum(x, 0) - x * t + jnp.log1p(jnp.exp(-jnp.abs(x))))
        kl_ref = -0.5 * jnp.sum(1 + logvar - mu ** 2 - jnp.exp(logvar))
        recon_ref = mel_ref + gate_ref
        total_ref = recon_ref + kl_weight * kl_ref

        assert abs(float(recon_loss) - float(recon_ref)) < 1e-3, (cfg, recon_loss, recon_ref)
        assert abs(float(kl_loss) - float(kl_ref)) < 1e-3, (cfg, kl_loss, kl_ref)
        assert abs(float(total_loss) - float(total_ref)) < 1e-3, (cfg, total_loss, total_ref)

    print("KERNEL_OK")
</pallas_src>

<mosaic_0001>
module attributes {stable_mosaic.version = 11 : i64} {
  func.func @_loss_kernel(%arg0: i32, %arg1: i32, %arg2: memref<16x128xf32, #tpu.memory_space<vmem>>, %arg3: memref<16x128xf32, #tpu.memory_space<vmem>>, %arg4: memref<16x128xf32, #tpu.memory_space<vmem>>, %arg5: memref<1x128xf32, #tpu.memory_space<vmem>>, %arg6: memref<1x128xf32, #tpu.memory_space<vmem>>, %arg7: memref<2x32xf32, #tpu.memory_space<vmem>>, %arg8: memref<2x32xf32, #tpu.memory_space<vmem>>, %arg9: memref<1x1xf32, #tpu.memory_space<smem>>, %arg10: memref<1x1xf32, #tpu.memory_space<smem>>, %arg11: memref<1x1xf32, #tpu.memory_space<smem>>, %arg12: memref<16x128xf32, #tpu.memory_space<vmem>>) attributes {dimension_semantics = [#tpu.dimension_semantics<arbitrary>, #tpu.dimension_semantics<arbitrary>], iteration_bounds = array<i64: 1, 1>, scalar_prefetch = 0 : i64, scratch_operands = 1 : i64, tpu.core_type = #tpu.core_type<tc>, window_params = [{transform_indices = @transform_0, window_bounds = array<i64: 16, 128>}, {transform_indices = @transform_1, window_bounds = array<i64: 16, 128>}, {transform_indices = @transform_2, window_bounds = array<i64: 16, 128>}, {pipeline_mode = #tpu.pipeline_mode<synchronous>, transform_indices = @transform_3, window_bounds = array<i64: 1, 128>}, {pipeline_mode = #tpu.pipeline_mode<synchronous>, transform_indices = @transform_4, window_bounds = array<i64: 1, 128>}, {pipeline_mode = #tpu.pipeline_mode<synchronous>, transform_indices = @transform_5, window_bounds = array<i64: 2, 32>}, {pipeline_mode = #tpu.pipeline_mode<synchronous>, transform_indices = @transform_6, window_bounds = array<i64: 2, 32>}, {transform_indices = @transform_7, window_bounds = array<i64: 1, 1>}, {transform_indices = @transform_8, window_bounds = array<i64: 1, 1>}, {transform_indices = @transform_9, window_bounds = array<i64: 1, 1>}]} {
    %c0_i32 = arith.constant 0 : i32
    %0 = arith.cmpi eq, %arg0, %c0_i32 : i32
    %c0_i32_0 = arith.constant 0 : i32
    %1 = arith.cmpi eq, %arg1, %c0_i32_0 : i32
    %2 = arith.andi %0, %1 : i1
    %c0_i32_1 = arith.constant 0 : i32
    %3 = arith.cmpi eq, %arg0, %c0_i32_1 : i32
    %c0_i32_2 = arith.constant 0 : i32
    %4 = arith.cmpi eq, %arg1, %c0_i32_2 : i32
    %5 = arith.andi %3, %4 : i1
    %6 = arith.extui %2 : i1 to i32
    %c0_i32_3 = arith.constant 0 : i32
    %7 = arith.cmpi ne, %6, %c0_i32_3 : i32
    scf.if %7 {
      %cst = arith.constant 0.000000e+00 : f32
      %21 = vector.broadcast %cst : f32 to vector<16x128xf32>
      %c0_14 = arith.constant 0 : index
      %c0_15 = arith.constant 0 : index
      %22 = vector.load %arg12[%c0_14, %c0_15] : memref<16x128xf32, #tpu.memory_space<vmem>>, vector<16x128xf32>
      tpu.vector_store %arg12[%c0_14, %c0_15], %21 {strides = array<i32>} : memref<16x128xf32, #tpu.memory_space<vmem>>, vector<16x128xf32>,
      %c0_16 = arith.constant 0 : index
      %c0_17 = arith.constant 0 : index
      %23 = vector.load %arg5[%c0_16, %c0_17] : memref<1x128xf32, #tpu.memory_space<vmem>>, vector<1x128xf32>
      %c0_18 = arith.constant 0 : index
      %c0_19 = arith.constant 0 : index
      %24 = vector.load %arg6[%c0_18, %c0_19] : memref<1x128xf32, #tpu.memory_space<vmem>>, vector<1x128xf32>
      %25 = math.absf %23 : vector<1x128xf32>
      %cst_20 = arith.constant 0.000000e+00 : f32
      %26 = vector.broadcast %cst_20 : f32 to vector<1x128xf32>
      %27 = arith.subf %26, %25 : vector<1x128xf32>
      %28 = math.exp %27 : vector<1x128xf32>
      %cst_21 = arith.constant 9.99999997E-7 : f32
      %29 = vector.broadcast %cst_21 : f32 to vector<1x128xf32>
      %30 = arith.cmpf olt, %28, %29 : vector<1x128xf32>
      %cst_22 = arith.constant 1.000000e+00 : f32
      %31 = vector.broadcast %cst_22 : f32 to vector<1x128xf32>
      %32 = arith.addf %31, %28 : vector<1x128xf32>
      %33 = math.log %32 : vector<1x128xf32>
      %34 = arith.select %30, %28, %33 : vector<1x128xi1>, vector<1x128xf32>
      %cst_23 = arith.constant 0.000000e+00 : f32
      %35 = vector.broadcast %cst_23 : f32 to vector<1x128xf32>
      %36 = arith.maximumf %23, %35 : vector<1x128xf32>
      %37 = arith.mulf %23, %24 : vector<1x128xf32>
      %38 = arith.subf %36, %37 : vector<1x128xf32>
      %39 = arith.addf %38, %34 : vector<1x128xf32>
      %40 = vector.shape_cast %39 : vector<1x128xf32> to vector<1x1x128xf32>
      %cst_24 = arith.constant dense<0.000000e+00> : vector<1xf32>
      %41 = vector.multi_reduction <add>, %40, %cst_24 [1, 2] : vector<1x1x128xf32> to vector<1xf32>
      %42 = vector.shape_cast %41 : vector<1xf32> to vector<1x1x1xf32>
      %43 = vector.extract %42[0, 0, 0] : f32 from vector<1x1x1xf32>
      %cst_25 = arith.constant 3.125000e-02 : f32
      %44 = arith.mulf %43, %cst_25 : f32
      %c0_26 = arith.constant 0 : index
      %c0_27 = arith.constant 0 : index
      %45 = memref.load %arg10[%c0_26, %c0_27] : memref<1x1xf32, #tpu.memory_space<smem>>
      memref.store %44, %arg10[%c0_26, %c0_27] : memref<1x1xf32, #tpu.memory_space<smem>>
      %c0_28 = arith.constant 0 : index
      %c0_29 = arith.constant 0 : index
      %46 = vector.load %arg7[%c0_28, %c0_29] : memref<2x32xf32, #tpu.memory_space<vmem>>, vector<2x32xf32>
      %c0_30 = arith.constant 0 : index
      %c0_31 = arith.constant 0 : index
      %47 = vector.load %arg8[%c0_30, %c0_31] : memref<2x32xf32, #tpu.memory_space<vmem>>, vector<2x32xf32>
      %cst_32 = arith.constant 1.000000e+00 : f32
      %48 = vector.broadcast %cst_32 : f32 to vector<2x32xf32>
      %49 = arith.addf %48, %47 : vector<2x32xf32>
      %50 = arith.mulf %46, %46 : vector<2x32xf32>
      %51 = arith.subf %49, %50 : vector<2x32xf32>
      %52 = math.exp %47 : vector<2x32xf32>
      %53 = arith.subf %51, %52 : vector<2x32xf32>
      %54 = vector.shape_cast %53 : vector<2x32xf32> to vector<1x2x32xf32>
      %cst_33 = arith.constant dense<0.000000e+00> : vector<1xf32>
      %55 = vector.multi_reduction <add>, %54, %cst_33 [1, 2] : vector<1x2x32xf32> to vector<1xf32>
      %56 = vector.shape_cast %55 : vector<1xf32> to vector<1x1x1xf32>
      %57 = vector.extract %56[0, 0, 0] : f32 from vector<1x1x1xf32>
      %cst_34 = arith.constant -5.000000e-01 : f32
      %58 = arith.mulf %cst_34, %57 : f32
      %c0_35 = arith.constant 0 : index
      %c0_36 = arith.constant 0 : index
      %59 = memref.load %arg11[%c0_35, %c0_36] : memref<1x1xf32, #tpu.memory_space<smem>>
      memref.store %58, %arg11[%c0_35, %c0_36] : memref<1x1xf32, #tpu.memory_space<smem>>
    } else {
    }
    %c0 = arith.constant 0 : index
    %c0_4 = arith.constant 0 : index
    %8 = vector.load %arg4[%c0, %c0_4] : memref<16x128xf32, #tpu.memory_space<vmem>>, vector<16x128xf32>
    %c0_5 = arith.constant 0 : index
    %c0_6 = arith.constant 0 : index
    %9 = vector.load %arg2[%c0_5, %c0_6] : memref<16x128xf32, #tpu.memory_space<vmem>>, vector<16x128xf32>
    %10 = arith.subf %9, %8 : vector<16x128xf32>
    %c0_7 = arith.constant 0 : index
    %c0_8 = arith.constant 0 : index
    %11 = vector.load %arg3[%c0_7, %c0_8] : memref<16x128xf32, #tpu.memory_space<vmem>>, vector<16x128xf32>
    %12 = arith.subf %11, %8 : vector<16x128xf32>
    %c0_9 = arith.constant 0 : index
    %c0_10 = arith.constant 0 : index
    %13 = vector.load %arg12[%c0_9, %c0_10] : memref<16x128xf32, #tpu.memory_space<vmem>>, vector<16x128xf32>
    %14 = arith.mulf %10, %10 : vector<16x128xf32>
    %15 = arith.mulf %12, %12 : vector<16x128xf32>
    %16 = arith.addf %14, %15 : vector<16x128xf32>
    %17 = arith.addf %13, %16 : vector<16x128xf32>
    %c0_11 = arith.constant 0 : index
    %c0_12 = arith.constant 0 : index
    %18 = vector.load %arg12[%c0_11, %c0_12] : memref<16x128xf32, #tpu.memory_space<vmem>>, vector<16x128xf32>
    tpu.vector_store %arg12[%c0_11, %c0_12], %17 {strides = array<i32>} : memref<16x128xf32, #tpu.memory_space<vmem>>, vector<16x128xf32>,
    %19 = arith.extui %5 : i1 to i32
    %c0_i32_13 = arith.constant 0 : i32
    %20 = arith.cmpi ne, %19, %c0_i32_13 : i32
    scf.if %20 {
      %c0_14 = arith.constant 0 : index
      %c0_15 = arith.constant 0 : index
      %21 = vector.load %arg12[%c0_14, %c0_15] : memref<16x128xf32, #tpu.memory_space<vmem>>, vector<16x128xf32>
      %22 = vector.shape_cast %21 : vector<16x128xf32> to vector<1x16x128xf32>
      %cst = arith.constant dense<0.000000e+00> : vector<1xf32>
      %23 = vector.multi_reduction <add>, %22, %cst [1, 2] : vector<1x16x128xf32> to vector<1xf32>
      %24 = vector.shape_cast %23 : vector<1xf32> to vector<1x1x1xf32>
      %25 = vector.extract %24[0, 0, 0] : f32 from vector<1x1x1xf32>
      %cst_16 = arith.constant 3.906250e-03 : f32
      %26 = arith.mulf %25, %cst_16 : f32
      %c0_17 = arith.constant 0 : index
      %c0_18 = arith.constant 0 : index
      %27 = memref.load %arg9[%c0_17, %c0_18] : memref<1x1xf32, #tpu.memory_space<smem>>
      memref.store %26, %arg9[%c0_17, %c0_18] : memref<1x1xf32, #tpu.memory_space<smem>>
    } else {
    }
    return
  }
  func.func @transform_0(%arg0: i32, %arg1: i32) -> (i32, i32) {
    %c0_i32 = arith.constant 0 : i32
    return %arg0, %arg1 : i32, i32
  }
  func.func @transform_1(%arg0: i32, %arg1: i32) -> (i32, i32) {
    %c0_i32 = arith.constant 0 : i32
    return %arg0, %arg1 : i32, i32
  }
  func.func @transform_2(%arg0: i32, %arg1: i32) -> (i32, i32) {
    %c0_i32 = arith.constant 0 : i32
    return %arg0, %arg1 : i32, i32
  }
  func.func @transform_3(%arg0: i32, %arg1: i32) -> (i32, i32) {
    %c0_i32 = arith.constant 0 : i32
    %c0_i32_0 = arith.constant 0 : i32
    %c0_i32_1 = arith.constant 0 : i32
    return %c0_i32, %c0_i32_0 : i32, i32
  }
  func.func @transform_4(%arg0: i32, %arg1: i32) -> (i32, i32) {
    %c0_i32 = arith.constant 0 : i32
    %c0_i32_0 = arith.constant 0 : i32
    %c0_i32_1 = arith.constant 0 : i32
    return %c0_i32, %c0_i32_0 : i32, i32
  }
  func.func @transform_5(%arg0: i32, %arg1: i32) -> (i32, i32) {
    %c0_i32 = arith.constant 0 : i32
    %c0_i32_0 = arith.constant 0 : i32
    %c0_i32_1 = arith.constant 0 : i32
    return %c0_i32, %c0_i32_0 : i32, i32
  }
  func.func @transform_6(%arg0: i32, %arg1: i32) -> (i32, i32) {
    %c0_i32 = arith.constant 0 : i32
    %c0_i32_0 = arith.constant 0 : i32
    %c0_i32_1 = arith.constant 0 : i32
    return %c0_i32, %c0_i32_0 : i32, i32
  }
  func.func @transform_7(%arg0: i32, %arg1: i32) -> (i32, i32) {
    %c0_i32 = arith.constant 0 : i32
    %c0_i32_0 = arith.constant 0 : i32
    %c0_i32_1 = arith.constant 0 : i32
    return %c0_i32, %c0_i32_0 : i32, i32
  }
  func.func @transform_8(%arg0: i32, %arg1: i32) -> (i32, i32) {
    %c0_i32 = arith.constant 0 : i32
    %c0_i32_0 = arith.constant 0 : i32
    %c0_i32_1 = arith.constant 0 : i32
    return %c0_i32, %c0_i32_0 : i32, i32
  }
  func.func @transform_9(%arg0: i32, %arg1: i32) -> (i32, i32) {
    %c0_i32 = arith.constant 0 : i32
    %c0_i32_0 = arith.constant 0 : i32
    %c0_i32_1 = arith.constant 0 : i32
    return %c0_i32, %c0_i32_0 : i32, i32
  }
}

</mosaic_0001>

<llo_original>
// kernel: tpu_custom_call.1
$region0: #{tpu_custom_call.1}
  #allocation0 [shape = 'u32[]', space=smem, size = 0x4, offset = 0x4, fixed_abs, tag = 'smem constant byte address 0x4 - core index']
  #allocation1 [shape = 'u32[144,128]{1,0:T(1,128)}', space=vmem, size = 0x12000, scoped, tag = 'internal scratch']
  #allocation2 [shape = 'f32[16,128]{1,0:T(8,128)}', space=vmem, size = 0x2000, scoped, tag = 'scratch operand']
  %s0 = inlined_call_operand.hbm [shape: f32[16,128], index: 0, kind: input, shape index: {}]
  %s1 = inlined_call_operand.hbm [shape: f32[16,128], index: 1, kind: input, shape index: {}]
  %s2 = inlined_call_operand.hbm [shape: f32[16,128], index: 2, kind: input, shape index: {}]
  %s3 = inlined_call_operand.vmem [shape: f32[1,128], index: 3, kind: input, shape index: {}]
  %s4 = inlined_call_operand.vmem [shape: f32[1,128], index: 4, kind: input, shape index: {}]
  %s5 = inlined_call_operand.vmem [shape: f32[2,32], index: 5, kind: input, shape index: {}]
  %s6 = inlined_call_operand.vmem [shape: f32[2,32], index: 6, kind: input, shape index: {}]
  %s7 = inlined_call_operand.hbm [shape: f32[1,1], index: 7, kind: output, shape index: {0}]
  %s8 = inlined_call_operand.hbm [shape: f32[1,1], index: 8, kind: output, shape index: {1}]
  %s9 = inlined_call_operand.hbm [shape: f32[1,1], index: 9, kind: output, shape index: {2}]
  %10 = xla_tuple %s7, %s8, %s9
  %s11 = sld [smem:[#allocation0]]
  $region74: #{tpu_custom_call.1} parent=0
    _
  %s13 = ssub.s32 1, %s11
  %s14 = scalar_select 0, %s13, %s11
  $region1: #{tpu_custom_call.1} parent=0
    #allocation3 [shape = 'u8[8192]{0}', space=vmem, size = 0x2000, scoped, tag = 'input window, operand 0, single buffered']
    #allocation4 [shape = 's32[1]{0}', space=sflag, size = 0x4, scoped, tag = 'scoped memory for tpu_custom_call.1']
    #allocation5 [shape = 's32[1]{0}', space=sflag, size = 0x4, scoped, tag = 'scoped memory for tpu_custom_call.1']
    #allocation6 [shape = 'u8[8192]{0}', space=vmem, size = 0x2000, scoped, tag = 'input window, operand 1, single buffered']
    #allocation7 [shape = 's32[1]{0}', space=sflag, size = 0x4, scoped, tag = 'scoped memory for tpu_custom_call.1']
    #allocation8 [shape = 'u8[8192]{0}', space=vmem, size = 0x2000, scoped, tag = 'input window, operand 2, single buffered']
    #allocation9 [shape = 'u8[512]{0}', space=smem, size = 0x200, scoped, tag = 'output window, operand 0, single buffered']
    #allocation10 [shape = 'u8[512]{0}', space=smem, size = 0x200, scoped, tag = 'output window, operand 1, single buffered']
    #allocation11 [shape = 's32[1]{0}', space=sflag, size = 0x4, scoped, tag = 'scoped memory for tpu_custom_call.1']
    #allocation12 [shape = 'u8[512]{0}', space=smem, size = 0x200, scoped, tag = 'output window, operand 2, single buffered']
    %15 = vsyncpa [#allocation4], 0
    %16 = vsyncpa [#allocation7], 0
    %17 = vsyncpa [#allocation5], 0
    %18 = vsyncpa [#allocation11], 0
    // Predicated region
    $region2: #{tpu_custom_call.1} parent=1 // pred_check
      _
    $region3: #{tpu_custom_call.1} parent=1 // pred_check_branch
      %20 = sbr.rel (0) target = $region5
    $region4: #{tpu_custom_call.1} parent=1 // pred_region
      %s22 = ssub.s32 256, 256
      %23 = vsyncadd [#allocation4], %s22
      %s24 = sshll.u32 [#allocation3], 4
      %s25 = int_to_ptr.vmem [resolvable:$true] %s24
      %30 = dma.hbm_to_vmem [thread:$0]  %s0, 256, %s25, [#allocation4], 128, 128, 8
    $region5: #{tpu_custom_call.1} parent=1 // pred_fallthru
      _
    // Predicated region
    $region6: #{tpu_custom_call.1} parent=1 // pred_check
      _
    $region7: #{tpu_custom_call.1} parent=1 // pred_check_branch
      %32 = sbr.rel (0) target = $region9
    $region8: #{tpu_custom_call.1} parent=1 // pred_region
      %s34 = ssub.s32 256, 256
      %35 = vsyncadd [#allocation7], %s34
      %s36 = sshll.u32 [#allocation6], 4
      %s37 = int_to_ptr.vmem [resolvable:$true] %s36
      %42 = dma.hbm_to_vmem [thread:$0]  %s1, 256, %s37, [#allocation7], 128, 128, 8
    $region9: #{tpu_custom_call.1} parent=1 // pred_fallthru
      _
    // Predicated region
    $region10: #{tpu_custom_call.1} parent=1 // pred_check
      _
    $region11: #{tpu_custom_call.1} parent=1 // pred_check_branch
      %44 = sbr.rel (0) target = $region13
    $region12: #{tpu_custom_call.1} parent=1 // pred_region
      %s46 = ssub.s32 256, 256
      %47 = vsyncadd [#allocation7], %s46
      %s48 = sshll.u32 [#allocation8], 4
      %s49 = int_to_ptr.vmem [resolvable:$true] %s48
      %54 = dma.hbm_to_vmem [thread:$0]  %s2, 256, %s49, [#allocation7], 128, 128, 8
    $region13: #{tpu_custom_call.1} parent=1 // pred_fallthru
      _
    // Predicated region
    $region14: #{tpu_custom_call.1} parent=1 // pred_check
      _
    $region15: #{tpu_custom_call.1} parent=1 // pred_check_branch
      %56 = sbr.rel (0) target = $region17
    $region16: #{tpu_custom_call.1} parent=1 // pred_region
      _
    $region17: #{tpu_custom_call.1} parent=1 // pred_fallthru
      _
    // Predicated region
    $region18: #{tpu_custom_call.1} parent=1 // pred_check
      _
    $region19: #{tpu_custom_call.1} parent=1 // pred_check_branch
      %58 = sbr.rel (0) target = $region21
    $region20: #{tpu_custom_call.1} parent=1 // pred_region
      _
    $region21: #{tpu_custom_call.1} parent=1 // pred_fallthru
      _
    // Predicated region
    $region22: #{tpu_custom_call.1} parent=1 // pred_check
      _
    $region23: #{tpu_custom_call.1} parent=1 // pred_check_branch
      %60 = sbr.rel (0) target = $region25
    $region24: #{tpu_custom_call.1} parent=1 // pred_region
      _
    $region25: #{tpu_custom_call.1} parent=1 // pred_fallthru
      _
    // Predicated region
    $region26: #{tpu_custom_call.1} parent=1 // pred_check
      _
    $region27: #{tpu_custom_call.1} parent=1 // pred_check_branch
      %62 = sbr.rel (0) target = $region29
    $region28: #{tpu_custom_call.1} parent=1 // pred_region
      _
    $region29: #{tpu_custom_call.1} parent=1 // pred_fallthru
      _
    // Predicated region
    $region30: #{tpu_custom_call.1} parent=1 // pred_check
      _
    $region31: #{tpu_custom_call.1} parent=1 // pred_check_branch
      %64 = sbr.rel (0) target = $region33
    $region32: #{tpu_custom_call.1} parent=1 // pred_region
      %65 = dma.done [#allocation4], 256
    $region33: #{tpu_custom_call.1} parent=1 // pred_fallthru
      _
    // Predicated region
    $region34: #{tpu_custom_call.1} parent=1 // pred_check
      _
    $region35: #{tpu_custom_call.1} parent=1 // pred_check_branch
      %67 = sbr.rel (0) target = $region37
    $region36: #{tpu_custom_call.1} parent=1 // pred_region
      %68 = dma.done [#allocation7], 256
    $region37: #{tpu_custom_call.1} parent=1 // pred_fallthru
      _
    // Predicated region
    $region38: #{tpu_custom_call.1} parent=1 // pred_check
      _
    $region39: #{tpu_custom_call.1} parent=1 // pred_check_branch
      %70 = sbr.rel (0) target = $region41
    $region40: #{tpu_custom_call.1} parent=1 // pred_region
      %71 = dma.done [#allocation7], 256
    $region41: #{tpu_custom_call.1} parent=1 // pred_fallthru
      _
    %p72 = scmp.eq.s32.totalorder 0, 0
    %p73 = scmp.eq.s32.totalorder 0, 0
    %p74 = pnand %p72, %p73
    %p75 = pneg %p74
    // Predicated region
    $region42: #{tpu_custom_call.1} parent=1 // pred_check
      _
    $region43: #{tpu_custom_call.1} parent=1 // pred_check_branch
      %77 = sbr.rel (%p74) target = $region45
    $region44: #{tpu_custom_call.1} parent=1 // pred_region
      %78 = vst [vmem:[#allocation2] sm:$0xff] 0.0
      %79 = vst [vmem:[#allocation2 + $0x8] sm:$0xff] 0.0
      %v80 = vld [vmem:[%s3] sm:$0x1]
      %v81 = vld [vmem:[%s4] sm:$0x1]
      %v82 = vand.u32 2147483647, %v80
      %v83 = vsub.f32 0.0, %v82
      %v84 = vmul.f32 %v83, 1.442695
      %v85 = vpow.pop %v84
      %vm86 = vcmp.lt.f32.partialorder %v85, 1e-06
      %v87 = vadd.f32 %v85, 1.0
      %v88 = vlog2.pop %v87
      %v89 = vmul.f32 %v88, 0.6931472
      %v90 = vsel %vm86, %v85, %v89
      %v91 = vmax.f32 %v80, 0.0
      %v92 = vmul.f32 %v80, %v81
      %v93 = vsub.f32 %v91, %v92
      %v94 = vadd.f32 %v93, %v90
      %vm95 = vcmask 1040384
      %v96 = vsel %vm95, %v94, 0.0
      %97 = vadd.xlane.f32.xlu0 %v96
      %v98 = vpop.xlane.xlu0 %97
      %v99 = vrot.slane %v98, 4
      %v100 = vadd.f32 %v98, %v99
      %v101 = vrot.slane %v100, 2
      %v102 = vadd.f32 %v100, %v101
      %v103 = vrot.slane %v102, 1
      %v104 = vadd.f32 %v102, %v103
      %s105 = vtos %v104
      %s106 = smul.f32 %s105, 0.03125
      %s107 = scalar_lea.smem [#allocation10], 0
      %108 = sst [smem:[%s107]] %s106
      %v109 = vld [vmem:[%s5] sm:$0x3]
      %v110 = vld [vmem:[%s6] sm:$0x3]
      %v111 = vadd.f32 %v110, 1.0
      %v112 = vmul.f32 %v109, %v109
      %v113 = vsub.f32 %v111, %v112
      %v114 = vmul.f32 %v110, 1.442695
      %v115 = vpow.pop %v114
      %v116 = vsub.f32 %v113, %v115
      %vm117 = vcmask 254976
      %v118 = vsel %vm117, %v116, 0.0
      %119 = vadd.xlane.f32.xlu0 %v118
      %v120 = vpop.xlane.xlu0 %119
      %v121 = vrot.slane %v120, 4
      %v122 = vadd.f32 %v120, %v121
      %v123 = vrot.slane %v122, 2
      %v124 = vadd.f32 %v122, %v123
      %v125 = vrot.slane %v124, 1
      %v126 = vadd.f32 %v124, %v125
      %s127 = vtos %v126
      %s128 = smul.f32 %s127, -0.5
      %s129 = scalar_lea.smem [#allocation12], 0
      %130 = sst [smem:[%s129]] %s128
    $region45: #{tpu_custom_call.1} parent=1 // pred_fallthru
      _
    %v131 = vld [vmem:[#allocation8] sm:$0xff]
    %v132 = vld [vmem:[#allocation8 + $0x8] sm:$0xff]
    %v133 = vld [vmem:[#allocation3] sm:$0xff]
    %v134 = vld [vmem:[#allocation3 + $0x8] sm:$0xff]
    %v135 = vsub.f32 %v133, %v131
    %v136 = vsub.f32 %v134, %v132
    %v137 = vld [vmem:[#allocation6] sm:$0xff]
    %v138 = vld [vmem:[#allocation6 + $0x8] sm:$0xff]
    %v139 = vsub.f32 %v137, %v131
    %v140 = vsub.f32 %v138, %v132
    %v141 = vld [vmem:[#allocation2] sm:$0xff]
    %v142 = vld [vmem:[#allocation2 + $0x8] sm:$0xff]
    %v143 = vmul.f32 %v135, %v135
    %v144 = vmul.f32 %v136, %v136
    %v145 = vmul.f32 %v139, %v139
    %v146 = vmul.f32 %v140, %v140
    %v147 = vadd.f32 %v143, %v145
    %v148 = vadd.f32 %v144, %v146
    %v149 = vadd.f32 %v141, %v147
    %v150 = vadd.f32 %v142, %v148
    %151 = vst [vmem:[#allocation2] sm:$0xff] %v149
    %152 = vst [vmem:[#allocation2 + $0x8] sm:$0xff] %v150
    // Predicated region
    $region46: #{tpu_custom_call.1} parent=1 // pred_check
      _
    $region47: #{tpu_custom_call.1} parent=1 // pred_check_branch
      %154 = sbr.rel (%p74) target = $region49
    $region48: #{tpu_custom_call.1} parent=1 // pred_region
      %v155 = vld [vmem:[#allocation2] sm:$0xff]
      %v156 = vld [vmem:[#allocation2 + $0x8] sm:$0xff]
      %v157 = vadd.f32 %v155, %v156
      %158 = vadd.xlane.f32.xlu0 %v157
      %v159 = vpop.xlane.xlu0 %158
      %v160 = vrot.slane %v159, 4
      %v161 = vadd.f32 %v159, %v160
      %v162 = vrot.slane %v161, 2
      %v163 = vadd.f32 %v161, %v162
      %v164 = vrot.slane %v163, 1
      %v165 = vadd.f32 %v163, %v164
      %s166 = vtos %v165
      %s167 = smul.f32 %s166, 0.00390625
      %s168 = scalar_lea.smem [#allocation9], 0
      %169 = sst [smem:[%s168]] %s167
    $region49: #{tpu_custom_call.1} parent=1 // pred_fallthru
      _
    // Predicated region
    $region50: #{tpu_custom_call.1} parent=1 // pred_check
      _
    $region51: #{tpu_custom_call.1} parent=1 // pred_check_branch
      %171 = sbr.rel (0) target = $region53
    $region52: #{tpu_custom_call.1} parent=1 // pred_region
      %s173 = ssub.s32 16, 16
      %174 = vsyncadd [#allocation5], %s173
      %177 = dma.smem_to_hbm [#allocation9], 16, %s7, [#allocation5]
    $region53: #{tpu_custom_call.1} parent=1 // pred_fallthru
      _
    // Predicated region
    $region54: #{tpu_custom_call.1} parent=1 // pred_check
      _
    $region55: #{tpu_custom_call.1} parent=1 // pred_check_branch
      %179 = sbr.rel (0) target = $region57
    $region56: #{tpu_custom_call.1} parent=1 // pred_region
      %s181 = ssub.s32 16, 16
      %182 = vsyncadd [#allocation11], %s181
      %185 = dma.smem_to_hbm [#allocation10], 16, %s8, [#allocation11]
    $region57: #{tpu_custom_call.1} parent=1 // pred_fallthru
      _
    // Predicated region
    $region58: #{tpu_custom_call.1} parent=1 // pred_check
      _
    $region59: #{tpu_custom_call.1} parent=1 // pred_check_branch
      %187 = sbr.rel (0) target = $region61
    $region60: #{tpu_custom_call.1} parent=1 // pred_region
      %s189 = ssub.s32 16, 16
      %190 = vsyncadd [#allocation11], %s189
      %193 = dma.smem_to_hbm [#allocation12], 16, %s9, [#allocation11]
    $region61: #{tpu_custom_call.1} parent=1 // pred_fallthru
      _
    // Predicated region
    $region62: #{tpu_custom_call.1} parent=1 // pred_check
      _
    $region63: #{tpu_custom_call.1} parent=1 // pred_check_branch
      %195 = sbr.rel (0) target = $region65
    $region64: #{tpu_custom_call.1} parent=1 // pred_region
      %196 = dma.done [#allocation5], 16
    $region65: #{tpu_custom_call.1} parent=1 // pred_fallthru
      _
    // Predicated region
    $region66: #{tpu_custom_call.1} parent=1 // pred_check
      _
    $region67: #{tpu_custom_call.1} parent=1 // pred_check_branch
      %198 = sbr.rel (0) target = $region69
    $region68: #{tpu_custom_call.1} parent=1 // pred_region
      %199 = dma.done [#allocation11], 16
    $region69: #{tpu_custom_call.1} parent=1 // pred_fallthru
      _
    // Predicated region
    $region70: #{tpu_custom_call.1} parent=1 // pred_check
      _
    $region71: #{tpu_custom_call.1} parent=1 // pred_check_branch
      %201 = sbr.rel (0) target = $region73
    $region72: #{tpu_custom_call.1} parent=1 // pred_region
      %202 = dma.done [#allocation11], 16
    $region73: #{tpu_custom_call.1} parent=1 // pred_fallthru
      _
    %203 = sfence
    %204 = vsyncpa [#allocation4], 1
    %205 = vsyncpa [#allocation7], 1
    %206 = vsyncpa [#allocation5], 1
    %207 = vsyncpa [#allocation11], 1

</llo_original>
